<compile_context>
chip_gen: v6e
topology: v6e:2x2x1
jax: 0.10.0
libtpu: 0.0.40
codegen_flags: <defaults>
</compile_context>

<pallas_src>
import jax
import jax.numpy as jnp
import numpy as np
from jax.experimental import pallas as pl
from jax.experimental.pallas import tpu as pltpu


# ----------------------------- in-kernel helpers -----------------------------

def _softmax_rows(scores):
    # Numerically stable softmax over the last (lane) axis, exact divide.
    m = jnp.max(scores, axis=-1, keepdims=True)
    p = jnp.exp(scores - m)
    return p / jnp.sum(p, axis=-1, keepdims=True)


# ---------------- Pallas kernels (one per attention method) ----------------

def _dot_kernel(h_ref, enc_ref, out_ref):
    h = h_ref[...].astype(jnp.float32)                 # (Bt, H)
    enc = enc_ref[...].astype(jnp.float32)             # (Bt, L, H)
    # score[b, l] = sum_h h[b,h] * enc[b,l,h]  -> (Bt, L), already lane-dense.
    s = jnp.sum(enc * h[:, None, :], axis=2)
    out_ref[...] = _softmax_rows(s)


def _general_kernel(h_ref, enc_ref, w_ref, out_ref):
    # PyTorch: energy = enc @ W^T + bias ; score = sum_h hidden * energy
    # Algebraic fold: score[b,l] = (hidden @ W)[b] . enc[b,l]  (+ hidden·bias,
    # which is constant across l and cancels in the row softmax -> dropped).
    h = h_ref[...].astype(jnp.float32)                                   # (Bt, H)
    q = jnp.dot(h, w_ref[...], preferred_element_type=jnp.float32)      # (Bt, H)
    enc = enc_ref[...].astype(jnp.float32)                               # (Bt, L, H)
    s = jnp.sum(enc * q[:, None, :], axis=2)                             # (Bt, L)
    out_ref[...] = _softmax_rows(s)


def _concat_kernel(h_ref, enc_ref, w1t_ref, w2t_ref, b_ref, v_ref, out_ref):
    # PyTorch: energy = tanh(cat(hidden, enc) @ W^T + bias) ; score = v · energy
    # W is split in the wrapper: W1 (hidden half), W2 (encoder half), transposed.
    Bt, L, H = enc_ref.shape
    h = h_ref[...].astype(jnp.float32)                                   # (Bt, H)
    # Hidden projection (shared by every l): one (Bt, H) @ (H, H) matmul + bias.
    a = jnp.dot(h, w1t_ref[...], preferred_element_type=jnp.float32) + b_ref[...]
    # Encoder projection: one flattened (Bt*L, H) @ (H, H) MXU pass.
    enc_flat = enc_ref[...].astype(jnp.float32).reshape(Bt * L, H)
    e = jnp.dot(enc_flat, w2t_ref[...], preferred_element_type=jnp.float32)
    energy = jnp.tanh(e.reshape(Bt, L, H) + a[:, None, :])               # (Bt, L, H)
    s = jnp.sum(energy * v_ref[...][None, :, :], axis=2)                 # (Bt, L)
    out_ref[...] = _softmax_rows(s)


# ---------------- wrapper ----------------

def _pick_batch_tile(B, L, H, itemsize):
    """Largest batch tile whose resident set fits a conservative VMEM budget.

    Resident set per grid step: double-buffered enc block (bt, L, H) in the
    input dtype, double-buffered f32 output block (bt, L), the hidden block and
    small weights.  A ~24 MiB budget fits comfortably under the 32 MiB
    vmem_limit_bytes we request, which is valid on v5e/v6e (128 MiB physical)
    and v7x (64 MiB physical).
    """
    budget = 24 << 20
    bt = B
    # >= 2 grid steps when the batch is big enough so v7x megacore sharding
    # (dimension_semantics=("parallel",)) has work for both TensorCores.
    if B >= 16:
        bt = min(bt, -(-B // 2))

    def cost(b):
        return 2 * b * L * H * itemsize + 2 * b * L * 4 + b * H * itemsize

    while bt > 8 and cost(bt) > budget:
        bt //= 2
    if bt != B:
        bt = max(8, (bt // 8) * 8)   # tiled path: keep the sublane multiple of 8
    return bt


def attn_forward(method, hidden, encoder_outputs, params=None):
    """hidden: (1,B,H), encoder_outputs: (L,B,H) -> (B,1,L) attention weights."""
    _, B, H = hidden.shape
    L = encoder_outputs.shape[0]
    h2 = hidden[0]                                        # (B, H), native dtype
    # One wrapper-side transpose to (B, L, H): the kernels then emit the
    # lane-dense (Bt, L) slab directly with no in-kernel shuffle.
    enc = jnp.transpose(encoder_outputs, (1, 0, 2))       # (B, L, H), native dtype

    bt = _pick_batch_tile(B, L, H, jnp.dtype(enc.dtype).itemsize)
    grid = (pl.cdiv(B, bt),)

    h_spec = pl.BlockSpec((bt, H), lambda i: (i, 0))
    enc_spec = pl.BlockSpec((bt, L, H), lambda i: (i, 0, 0))
    out_spec = pl.BlockSpec((bt, L), lambda i: (i, 0))    # lane-dense (Bt, L) slab
    out_shape = jax.ShapeDtypeStruct((B, L), jnp.float32)
    full = lambda shp: pl.BlockSpec(shp, lambda i: (0,) * len(shp))
    cp = pltpu.CompilerParams(dimension_semantics=("parallel",),
                              vmem_limit_bytes=32 << 20)

    if method == 'dot':
        out2d = pl.pallas_call(
            _dot_kernel, out_shape=out_shape, grid=grid,
            in_specs=[h_spec, enc_spec], out_specs=out_spec,
            compiler_params=cp)(h2, enc)
    elif method == 'general':
        W = params['W'].astype(jnp.float32)               # (H, H) torch Linear weight
        out2d = pl.pallas_call(
            _general_kernel, out_shape=out_shape, grid=grid,
            in_specs=[h_spec, enc_spec, full((H, H))],
            out_specs=out_spec, compiler_params=cp)(h2, enc, W)
    elif method == 'concat':
        W = params['W'].astype(jnp.float32)               # (H, 2H)
        bias = params['b'].astype(jnp.float32).reshape(1, H)
        v = params['v'].astype(jnp.float32).reshape(1, H)
        w1t = W[:, :H].T                                  # hidden half, transposed
        w2t = W[:, H:].T                                  # encoder half, transposed
        out2d = pl.pallas_call(
            _concat_kernel, out_shape=out_shape, grid=grid,
            in_specs=[h_spec, enc_spec, full((H, H)), full((H, H)),
                      full((1, H)), full((1, H))],
            out_specs=out_spec, compiler_params=cp)(h2, enc, w1t, w2t, bias, v)
    else:
        raise ValueError(method, 'is not an appropriate attention method.')

    return out2d[:, None, :]                              # (B, 1, L)


# ---------------- pure-JAX reference (mirrors the PyTorch forward) ----------------

def attn_reference(method, hidden, encoder_outputs, params=None):
    if method == 'dot':
        energies = jnp.sum(hidden * encoder_outputs, axis=2)                    # (L, B)
    elif method == 'general':
        energy = encoder_outputs @ params['W'].T + params['b']
        energies = jnp.sum(hidden * energy, axis=2)
    elif method == 'concat':
        L = encoder_outputs.shape[0]
        h_exp = jnp.broadcast_to(hidden, (L,) + hidden.shape[1:])
        cat = jnp.concatenate([h_exp, encoder_outputs], axis=2)
        energy = jnp.tanh(cat @ params['W'].T + params['b'])
        energies = jnp.sum(params['v'] * energy, axis=2)
    energies = energies.T                                                       # (B, L)
    return jax.nn.softmax(energies, axis=1)[:, None, :]                         # (B, 1, L)


# ---------------- main ----------------

if __name__ == "__main__":
    B, L, H = 2, 8, 32
    key = jax.random.PRNGKey(0)
    k1, k2, k3, k4, k5 = jax.random.split(key, 5)

    hidden = jax.random.normal(k1, (1, B, H), dtype=jnp.float32)
    encoder_outputs = jax.random.normal(k2, (L, B, H), dtype=jnp.float32)

    params = {
        'dot': None,
        'general': {
            'W': 0.1 * jax.random.normal(k3, (H, H), dtype=jnp.float32),
            'b': 0.1 * jax.random.normal(k4, (H,), dtype=jnp.float32),
        },
        'concat': {
            'W': 0.1 * jax.random.normal(k3, (H, 2 * H), dtype=jnp.float32),
            'b': 0.1 * jax.random.normal(k4, (H,), dtype=jnp.float32),
            'v': jax.random.normal(k5, (H,), dtype=jnp.float32),
        },
    }

    for method in ['dot', 'general', 'concat']:
        out = attn_forward(method, hidden, encoder_outputs, params[method])
        out = jax.block_until_ready(out)
        ref = attn_reference(method, hidden, encoder_outputs, params[method])
        assert out.shape == (B, 1, L), (method, out.shape)
        # Exact softmax divide -> only f32 rounding / reassociation differences.
        np.testing.assert_allclose(np.asarray(out), np.asarray(ref),
                                   rtol=1e-4, atol=1e-6)

    print("KERNEL_OK")
</pallas_src>

<mosaic_0001>
module attributes {stable_mosaic.version = 11 : i64} {
  func.func @_dot_kernel(%arg0: i32, %arg1: memref<2x32xf32, #tpu.memory_space<vmem>>, %arg2: memref<2x8x32xf32, #tpu.memory_space<vmem>>, %arg3: memref<2x8xf32, #tpu.memory_space<vmem>>) attributes {dimension_semantics = [#tpu.dimension_semantics<parallel>], iteration_bounds = array<i64: 1>, scalar_prefetch = 0 : i64, scratch_operands = 0 : i64, tpu.core_type = #tpu.core_type<tc>, window_params = [{transform_indices = @transform_0, window_bounds = array<i64: 2, 32>}, {transform_indices = @transform_1, window_bounds = array<i64: 2, 8, 32>}, {transform_indices = @transform_2, window_bounds = array<i64: 2, 8>}]} {
    %c0 = arith.constant 0 : index
    %c0_0 = arith.constant 0 : index
    %0 = vector.load %arg1[%c0, %c0_0] : memref<2x32xf32, #tpu.memory_space<vmem>>, vector<2x32xf32>
    %c0_1 = arith.constant 0 : index
    %c0_2 = arith.constant 0 : index
    %c0_3 = arith.constant 0 : index
    %1 = vector.load %arg2[%c0_1, %c0_2, %c0_3] : memref<2x8x32xf32, #tpu.memory_space<vmem>>, vector<2x8x32xf32>
    %2 = vector.shape_cast %0 : vector<2x32xf32> to vector<2x1x32xf32>
    %3 = vector.broadcast %2 : vector<2x1x32xf32> to vector<2x8x32xf32>
    %4 = arith.mulf %1, %3 : vector<2x8x32xf32>
    %cst = arith.constant dense<0.000000e+00> : vector<2x8xf32>
    %5 = vector.multi_reduction <add>, %4, %cst [2] : vector<2x8x32xf32> to vector<2x8xf32>
    %cst_4 = arith.constant dense<0xFF800000> : vector<2xf32>
    %6 = vector.multi_reduction <maximumf>, %5, %cst_4 [1] : vector<2x8xf32> to vector<2xf32>
    %7 = vector.shape_cast %6 : vector<2xf32> to vector<2x1xf32>
    %8 = vector.broadcast %7 : vector<2x1xf32> to vector<2x8xf32>
    %9 = arith.subf %5, %8 : vector<2x8xf32>
    %10 = math.exp %9 : vector<2x8xf32>
    %cst_5 = arith.constant dense<0.000000e+00> : vector<2xf32>
    %11 = vector.multi_reduction <add>, %10, %cst_5 [1] : vector<2x8xf32> to vector<2xf32>
    %12 = vector.shape_cast %11 : vector<2xf32> to vector<2x1xf32>
    %13 = vector.broadcast %12 : vector<2x1xf32> to vector<2x8xf32>
    %14 = arith.divf %10, %13 : vector<2x8xf32>
    %c0_6 = arith.constant 0 : index
    %c0_7 = arith.constant 0 : index
    %15 = vector.load %arg3[%c0_6, %c0_7] : memref<2x8xf32, #tpu.memory_space<vmem>>, vector<2x8xf32>
    tpu.vector_store %arg3[%c0_6, %c0_7], %14 {strides = array<i32>} : memref<2x8xf32, #tpu.memory_space<vmem>>, vector<2x8xf32>,
    return
  }
  func.func @transform_0(%arg0: i32) -> (i32, i32) {
    %c0_i32 = arith.constant 0 : i32
    %c0_i32_0 = arith.constant 0 : i32
    return %arg0, %c0_i32 : i32, i32
  }
  func.func @transform_1(%arg0: i32) -> (i32, i32, i32) {
    %c0_i32 = arith.constant 0 : i32
    %c0_i32_0 = arith.constant 0 : i32
    %c0_i32_1 = arith.constant 0 : i32
    return %arg0, %c0_i32, %c0_i32_0 : i32, i32, i32
  }
  func.func @transform_2(%arg0: i32) -> (i32, i32) {
    %c0_i32 = arith.constant 0 : i32
    %c0_i32_0 = arith.constant 0 : i32
    return %arg0, %c0_i32 : i32, i32
  }
}

</mosaic_0001>

<llo_original>
// kernel: tpu_custom_call.1
$region0: #{tpu_custom_call.1}
  #allocation0 [shape = 'u32[]', space=smem, size = 0x4, offset = 0x4, fixed_abs, tag = 'smem constant byte address 0x4 - core index']
  #allocation1 [shape = 'u32[144,128]{1,0:T(1,128)}', space=vmem, size = 0x12000, scoped, tag = 'internal scratch']
  %s0 = inlined_call_operand.hbm [shape: f32[2,32], index: 0, kind: input, shape index: {}]
  %s1 = inlined_call_operand.hbm [shape: f32[2,8,32], index: 1, kind: input, shape index: {}]
  %s2 = inlined_call_operand.hbm [shape: f32[2,8], index: 2, kind: output, shape index: {}]
  %s3 = sld [smem:[#allocation0]]
  $region26: #{tpu_custom_call.1} parent=0
    _
  %s5 = ssub.s32 1, %s3
  %s6 = scalar_select 0, %s5, %s3
  $region1: #{tpu_custom_call.1} parent=0
    #allocation2 [shape = 'u8[1024]{0}', space=vmem, size = 0x400, scoped, tag = 'input window, operand 0, single buffered']
    #allocation3 [shape = 's32[1]{0}', space=sflag, size = 0x4, scoped, tag = 'scoped memory for tpu_custom_call.1']
    #allocation4 [shape = 's32[1]{0}', space=sflag, size = 0x4, scoped, tag = 'scoped memory for tpu_custom_call.1']
    #allocation5 [shape = 'u8[8192]{0}', space=vmem, size = 0x2000, scoped, tag = 'input window, operand 1, single buffered']
    #allocation6 [shape = 's32[1]{0}', space=sflag, size = 0x4, scoped, tag = 'scoped memory for tpu_custom_call.1']
    #allocation7 [shape = 'u8[1024]{0}', space=vmem, size = 0x400, scoped, tag = 'output window, operand 0, single buffered']
    %7 = vsyncpa [#allocation3], 0
    %8 = vsyncpa [#allocation6], 0
    %9 = vsyncpa [#allocation4], 0
    // Predicated region
    $region2: #{tpu_custom_call.1} parent=1 // pred_check
      _
    $region3: #{tpu_custom_call.1} parent=1 // pred_check_branch
      %11 = sbr.rel (0) target = $region5
    $region4: #{tpu_custom_call.1} parent=1 // pred_region
      %s13 = ssub.s32 32, 32
      %14 = vsyncadd [#allocation3], %s13
      %s16 = sshll.u32 [#allocation2], 4
      %s17 = int_to_ptr.vmem [resolvable:$true] %s16
      %19 = dma.hbm_to_vmem [thread:$0]  %s0, 32, %s17, [#allocation3]
    $region5: #{tpu_custom_call.1} parent=1 // pred_fallthru
      _
    // Predicated region
    $region6: #{tpu_custom_call.1} parent=1 // pred_check
      _
    $region7: #{tpu_custom_call.1} parent=1 // pred_check_branch
      %21 = sbr.rel (0) target = $region9
    $region8: #{tpu_custom_call.1} parent=1 // pred_region
      %s23 = ssub.s32 256, 256
      %24 = vsyncadd [#allocation6], %s23
      %s25 = sshll.u32 [#allocation5], 4
      %s26 = int_to_ptr.vmem [resolvable:$true] %s25
      %31 = dma.hbm_to_vmem [thread:$0]  %s1, 256, %s26, [#allocation6], 128, 128, 8
    $region9: #{tpu_custom_call.1} parent=1 // pred_fallthru
      _
    // Predicated region
    $region10: #{tpu_custom_call.1} parent=1 // pred_check
      _
    $region11: #{tpu_custom_call.1} parent=1 // pred_check_branch
      %33 = sbr.rel (0) target = $region13
    $region12: #{tpu_custom_call.1} parent=1 // pred_region
      %34 = dma.done [#allocation3], 32
    $region13: #{tpu_custom_call.1} parent=1 // pred_fallthru
      _
    // Predicated region
    $region14: #{tpu_custom_call.1} parent=1 // pred_check
      _
    $region15: #{tpu_custom_call.1} parent=1 // pred_check_branch
      %36 = sbr.rel (0) target = $region17
    $region16: #{tpu_custom_call.1} parent=1 // pred_region
      %37 = dma.done [#allocation6], 256
    $region17: #{tpu_custom_call.1} parent=1 // pred_fallthru
      _
    %v38 = vld [vmem:[#allocation2] sm:$0x3]
    %v39 = vld [vmem:[#allocation5] sm:$0xff]
    %v40 = vld [vmem:[#allocation5 + $0x8] sm:$0xff]
    %v43 = vunpack.c.l.s4 1966171168
    %v44 = vunpack.c.0.s8 %v43
    %v45 = vlaneseq
    %v46 = vshrl.u32 %v45, 7
    %v47 = vsub.s32 %v44, %v46
    %v48 = vrot.slane %v38, %v47
    %v49 = vcombine.high %v48, %v48
    %v51 = vunpack.c.l.s4 1966171168
    %v52 = vunpack.c.0.s8 %v51
    %v53 = vlaneseq
    %v54 = vshrl.u32 %v53, 7
    %v55 = vsub.s32 %v52, %v54
    %v56 = vrot.slane %v48, %v55
    %v58 = vunpack.c.l.s4 1966171168
    %v59 = vunpack.c.0.s8 %v58
    %v60 = vlaneseq
    %v61 = vshrl.u32 %v60, 7
    %v62 = vsub.s32 %v59, %v61
    %v63 = vrot.slane %v49, %v62
    %v64 = vlaneseq
    %v65 = vshrl.u32 %v64, 7
    %v66 = vsub.s32 0, %v65
    %v67 = vrot.slane %v56, %v66
    %v68 = vlaneseq
    %v69 = vshrl.u32 %v68, 7
    %v70 = vsub.s32 0, %v69
    %v71 = vrot.slane %v63, %v70
    %v74 = vmul.f32 %v39, %v67
    %v75 = vmul.f32 %v40, %v71
    %vm76 = vcmask 261120
    %v77 = vsel %vm76, %v74, 0.0
    %78 = vadd.xlane.f32.xlu0 %v77
    %v79 = vpop.xlane.xlu0 %78
    %v80 = vsel %vm76, %v75, 0.0
    %81 = vadd.xlane.f32.xlu0 %v80
    %v82 = vpop.xlane.xlu0 %81
    %v85 = vlaneseq
    %v86 = vand.u32 %v85, 127
    %v87 = vlaneseq
    %v88 = vshrl.u32 %v87, 7
    %v89 = vsub.s32 %v86, %v88
    %v90 = vrot.slane %v79, %v89
    %v91 = vlaneseq
    %v92 = vshrl.u32 %v91, 7
    %v93 = vsub.s32 %v86, %v92
    %v94 = vrot.slane %v82, %v93
    %vm95 = vcmask 1041409
    %v96 = vsel %vm95, %v94, %v90
    %vm98 = vcmask 58368
    %v99 = vsel %vm98, %v96, -inf
    %100 = vmax.xlane.f32.xlu0 %v99
    %v101 = vpop.xlane.xlu0 %100
    %v103 = vlaneseq
    %v104 = vshrl.u32 %v103, 7
    %v105 = vsub.s32 0, %v104
    %v106 = vrot.slane %v101, %v105
    %v107 = vlaneseq
    %v108 = vshrl.u32 %v107, 7
    %v109 = vsub.s32 1, %v108
    %v110 = vrot.slane %v101, %v109
    %v113 = vsub.f32 %v79, %v106
    %v114 = vsub.f32 %v82, %v110
    %v115 = vmul.f32 %v113, 1.442695
    %v116 = vpow.pop %v115
    %v117 = vmul.f32 %v114, 1.442695
    %v118 = vpow.pop %v117
    %121 = vset.pattern.permute.xlu0 0
    %122 = vperm.xlu0 %121, %v116
    %v123 = vpop.permute.xlu0 %122
    %124 = vset.pattern.permute.xlu0 0
    %125 = vperm.xlu0 %124, %v118
    %v126 = vpop.permute.xlu0 %125
    %v127 = vlaneseq
    %v128 = vshrl.u32 %v127, 7
    %v129 = vsub.s32 %v86, %v128
    %v130 = vrot.slane %v123, %v129
    %v131 = vlaneseq
    %v132 = vshrl.u32 %v131, 7
    %v133 = vsub.s32 %v86, %v132
    %v134 = vrot.slane %v126, %v133
    %v135 = vsel %vm95, %v134, %v130
    %v137 = vsel %vm98, %v135, 0.0
    %138 = vadd.xlane.f32.xlu0 %v137
    %v139 = vpop.xlane.xlu0 %138
    %v141 = vlaneseq
    %v142 = vshrl.u32 %v141, 7
    %v143 = vsub.s32 0, %v142
    %v144 = vrot.slane %v139, %v143
    %v145 = vlaneseq
    %v146 = vshrl.u32 %v145, 7
    %v147 = vsub.s32 1, %v146
    %v148 = vrot.slane %v139, %v147
    %v151 = vrcp.pop %v144
    %v152 = vmul.f32 %v116, %v151
    %v153 = vrcp.pop %v148
    %v154 = vmul.f32 %v118, %v153
    %157 = vset.pattern.permute.xlu0 0
    %158 = vperm.xlu0 %157, %v152
    %v159 = vpop.permute.xlu0 %158
    %160 = vset.pattern.permute.xlu0 0
    %161 = vperm.xlu0 %160, %v154
    %v162 = vpop.permute.xlu0 %161
    %v163 = vlaneseq
    %v164 = vshrl.u32 %v163, 7
    %v165 = vsub.s32 %v86, %v164
    %v166 = vrot.slane %v159, %v165
    %v167 = vlaneseq
    %v168 = vshrl.u32 %v167, 7
    %v169 = vsub.s32 %v86, %v168
    %v170 = vrot.slane %v162, %v169
    %v171 = vsel %vm95, %v170, %v166
    %173 = vst.msk [vmem:[#allocation7] sm:$0x3] %vm98, %v171
    // Predicated region
    $region18: #{tpu_custom_call.1} parent=1 // pred_check
      _
    $region19: #{tpu_custom_call.1} parent=1 // pred_check_branch
      %175 = sbr.rel (0) target = $region21
    $region20: #{tpu_custom_call.1} parent=1 // pred_region
      %s177 = ssub.s32 32, 32
      %178 = vsyncadd [#allocation4], %s177
      %s180 = sshll.u32 [#allocation7], 4
      %s181 = int_to_ptr.vmem [resolvable:$true] %s180
      %183 = dma.vmem_to_hbm [thread:$0]  %s181, 32, %s2, [#allocation4]
    $region21: #{tpu_custom_call.1} parent=1 // pred_fallthru
      _
    // Predicated region
    $region22: #{tpu_custom_call.1} parent=1 // pred_check
      _
    $region23: #{tpu_custom_call.1} parent=1 // pred_check_branch
      %185 = sbr.rel (0) target = $region25
    $region24: #{tpu_custom_call.1} parent=1 // pred_region
      %186 = dma.done [#allocation4], 32
    $region25: #{tpu_custom_call.1} parent=1 // pred_fallthru
      _
    %187 = vsyncpa [#allocation3], 1
    %188 = vsyncpa [#allocation6], 1
    %189 = vsyncpa [#allocation4], 1

</llo_original>
